<compile_context>
chip_gen: v7x
topology: tpu7x:2x2x1
jax: 0.10.0
libtpu: 0.0.40
codegen_flags: <defaults>
</compile_context>

<pallas_src>
import functools

import jax
import jax.numpy as jnp
from jax.experimental import pallas as pl
from jax.experimental.pallas import tpu as pltpu

K_IN = 300       # C*KH*KW = 3*10*10 (conv-as-matmul contraction size)
OC = 8           # conv output channels
OUT = 2          # linear output features
SLAB_ROWS = 16   # packed-param slab rows (>= 10, multiple of 8)


def dummy_model_kernel(x_ref, w1_ref, p_ref, o_ref):
    # Packed small params (constant block index -> fetched once, stays resident):
    #   rows 0..7  : w2 (8, 2)   [Linear weight, transposed]
    #   row  8     : b1 (1, 8)   [conv bias]
    #   row  9     : b2 (1, 2)   [linear bias]
    slab = p_ref[...]                        # (16, 8) f32
    w2 = slab[0:OC, 0:OUT]                   # (8, 2)
    b1 = slab[OC:OC + 1, :]                  # (1, 8)
    b2 = slab[OC + 1:OC + 2, 0:OUT]          # (1, 2)

    # Conv2d(3,8,k=10) over 10x10 input == (TM,300) @ (300,8) matmul on the MXU.
    # bf16 inputs, f32 accumulation.
    h = jnp.dot(x_ref[...], w1_ref[...], preferred_element_type=jnp.float32)
    h = jnp.maximum(h + b1, 0.0)             # + bias, ReLU
    # Dropout(p=0.5): identity in eval/inference mode.
    # TODO(synk): training-mode dropout (stochastic mask via pltpu.prng_*) not emitted.
    y = jnp.dot(h, w2, preferred_element_type=jnp.float32) + b2   # (TM, 2)
    o_ref[...] = y.astype(o_ref.dtype)


def prepare_params(conv_w, conv_b, lin_w, lin_b):
    """One-time parameter prep, hoisted out of the per-call forward path."""
    # Conv weight (8,3,10,10) -> (300, 8); cast to bf16 for the dominant matmul.
    w1 = conv_w.reshape(conv_w.shape[0], -1).T.astype(jnp.bfloat16)     # (300, 8)
    # Pack b1 / w2 / b2 into one small f32 slab (saves 3 tiny per-call DMAs).
    slab = jnp.zeros((SLAB_ROWS, OC), dtype=jnp.float32)
    slab = slab.at[0:OC, 0:OUT].set(lin_w.T.astype(jnp.float32))        # w2 (8,2)
    slab = slab.at[OC, :].set(conv_b.astype(jnp.float32))               # b1 (8,)
    slab = slab.at[OC + 1, 0:OUT].set(lin_b.astype(jnp.float32))        # b2 (2,)
    return w1, slab


@functools.partial(jax.jit, static_argnames=("tile_m",))
def dummy_model_forward(x_nchw, w1, slab, *, tile_m=512):
    """x_nchw: (B, 3, 10, 10) float32.  Returns (B, 2) float32 (eval mode)."""
    B = x_nchw.shape[0]
    x_flat = x_nchw.reshape(B, K_IN).astype(jnp.bfloat16)    # (B, 300) bf16

    # Pad B to a sublane-friendly multiple of the batch tile (no ragged tail).
    b_pad = max(16, ((B + 15) // 16) * 16)
    tm = min(tile_m, b_pad)
    b_pad = ((b_pad + tm - 1) // tm) * tm
    if b_pad != B:
        x_flat = jnp.pad(x_flat, ((0, b_pad - B), (0, 0)))

    out = pl.pallas_call(
        dummy_model_kernel,
        out_shape=jax.ShapeDtypeStruct((b_pad, OUT), jnp.float32),
        grid_spec=pltpu.PrefetchScalarGridSpec(
            num_scalar_prefetch=0,
            grid=(b_pad // tm,),
            in_specs=[
                pl.BlockSpec((tm, K_IN), lambda i: (i, 0)),        # streamed x tiles
                pl.BlockSpec((K_IN, OC), lambda i: (0, 0)),        # resident w1
                pl.BlockSpec((SLAB_ROWS, OC), lambda i: (0, 0)),   # resident param slab
            ],
            out_specs=pl.BlockSpec((tm, OUT), lambda i: (i, 0)),
        ),
        compiler_params=pltpu.CompilerParams(
            dimension_semantics=("parallel",),   # batch axis is fully independent
        ),
    )(x_flat, w1, slab)
    return out[:B]


def _reference(x_nchw, conv_w, conv_b, lin_w, lin_b):
    """Pure-JAX f32 reference of the PyTorch forward (eval mode)."""
    B = x_nchw.shape[0]
    x_flat = x_nchw.reshape(B, -1)
    w1 = conv_w.reshape(conv_w.shape[0], -1).T
    h = jnp.maximum(x_flat @ w1 + conv_b, 0.0)
    return h @ lin_w.T + lin_b


if __name__ == "__main__":
    key = jax.random.PRNGKey(0)
    k_x, k_cw, k_cb, k_lw, k_lb = jax.random.split(key, 5)

    B = 2
    # Input consistent with the module: conv kernel 10 over spatial 10 -> 1x1.
    x = jax.random.normal(k_x, (B, 3, 10, 10), dtype=jnp.float32)

    # Deterministic parameter init (shapes of nn.Conv2d(3,8,10) / nn.Linear(8,2)).
    conv_w = jax.random.normal(k_cw, (8, 3, 10, 10), dtype=jnp.float32) * 0.05
    conv_b = jax.random.normal(k_cb, (8,), dtype=jnp.float32) * 0.05
    lin_w = jax.random.normal(k_lw, (2, 8), dtype=jnp.float32) * 0.2
    lin_b = jax.random.normal(k_lb, (2,), dtype=jnp.float32) * 0.2

    # One-time parameter prep (hoisted out of the forward path).
    w1, slab = prepare_params(conv_w, conv_b, lin_w, lin_b)

    out = dummy_model_forward(x, w1, slab)
    out = jax.block_until_ready(out)

    ref = _reference(x, conv_w, conv_b, lin_w, lin_b)
    assert out.shape == (B, 2), out.shape
    # bf16 cast on the dominant x/w1 stream (f32 accumulation) -> looser tolerance.
    assert jnp.allclose(out, ref, atol=3e-2, rtol=3e-2), (out, ref)

    print("KERNEL_OK")
</pallas_src>

<mosaic_0001>
module attributes {stable_mosaic.version = 11 : i64} {
  func.func @dummy_model_kernel(%arg0: i32, %arg1: memref<16x300xbf16, #tpu.memory_space<vmem>>, %arg2: memref<300x8xbf16, #tpu.memory_space<vmem>>, %arg3: memref<16x8xf32, #tpu.memory_space<vmem>>, %arg4: memref<16x2xf32, #tpu.memory_space<vmem>>) attributes {dimension_semantics = [#tpu.dimension_semantics<parallel>], iteration_bounds = array<i64: 1>, scalar_prefetch = 0 : i64, scratch_operands = 0 : i64, tpu.core_type = #tpu.core_type<tc>, window_params = [{transform_indices = @transform_0, window_bounds = array<i64: 16, 300>}, {pipeline_mode = #tpu.pipeline_mode<synchronous>, transform_indices = @transform_1, window_bounds = array<i64: 300, 8>}, {pipeline_mode = #tpu.pipeline_mode<synchronous>, transform_indices = @transform_2, window_bounds = array<i64: 16, 8>}, {transform_indices = @transform_3, window_bounds = array<i64: 16, 2>}]} {
    %c0 = arith.constant 0 : index
    %c0_0 = arith.constant 0 : index
    %0 = vector.load %arg3[%c0, %c0_0] : memref<16x8xf32, #tpu.memory_space<vmem>>, vector<16x8xf32>
    %1 = vector.extract_strided_slice %0 {offsets = [0, 0], sizes = [8, 2], strides = [1, 1]} : vector<16x8xf32> to vector<8x2xf32>
    %2 = vector.extract_strided_slice %0 {offsets = [8, 0], sizes = [1, 8], strides = [1, 1]} : vector<16x8xf32> to vector<1x8xf32>
    %3 = vector.extract_strided_slice %0 {offsets = [9, 0], sizes = [1, 2], strides = [1, 1]} : vector<16x8xf32> to vector<1x2xf32>
    %c0_1 = arith.constant 0 : index
    %c0_2 = arith.constant 0 : index
    %4 = vector.load %arg1[%c0_1, %c0_2] : memref<16x300xbf16, #tpu.memory_space<vmem>>, vector<16x300xbf16>
    %c0_3 = arith.constant 0 : index
    %c0_4 = arith.constant 0 : index
    %5 = vector.load %arg2[%c0_3, %c0_4] : memref<300x8xbf16, #tpu.memory_space<vmem>>, vector<300x8xbf16>
    %cst = arith.constant dense<0.000000e+00> : vector<16x8xf32>
    %6 = tpu.matmul %4, %5, %cst {dimension_numbers = #tpu.dot_dimension_numbers<[1], [0], [0], [1], [0, 0, 1, 1], [], []>} : vector<16x300xbf16>, vector<300x8xbf16>, vector<16x8xf32> -> vector<16x8xf32>
    %7 = vector.broadcast %2 : vector<1x8xf32> to vector<16x8xf32>
    %8 = arith.addf %6, %7 : vector<16x8xf32>
    %cst_5 = arith.constant 0.000000e+00 : f32
    %9 = vector.broadcast %cst_5 : f32 to vector<16x8xf32>
    %10 = arith.maximumf %8, %9 : vector<16x8xf32>
    %cst_6 = arith.constant dense<0.000000e+00> : vector<16x2xf32>
    %11 = tpu.matmul %10, %1, %cst_6 {dimension_numbers = #tpu.dot_dimension_numbers<[1], [0], [0], [1], [0, 0, 1, 1], [], []>} : vector<16x8xf32>, vector<8x2xf32>, vector<16x2xf32> -> vector<16x2xf32>
    %12 = vector.broadcast %3 : vector<1x2xf32> to vector<16x2xf32>
    %13 = arith.addf %11, %12 : vector<16x2xf32>
    %c0_7 = arith.constant 0 : index
    %c0_8 = arith.constant 0 : index
    %14 = vector.load %arg4[%c0_7, %c0_8] : memref<16x2xf32, #tpu.memory_space<vmem>>, vector<16x2xf32>
    tpu.vector_store %arg4[%c0_7, %c0_8], %13 {strides = array<i32>} : memref<16x2xf32, #tpu.memory_space<vmem>>, vector<16x2xf32>,
    return
  }
  func.func @transform_0(%arg0: i32) -> (i32, i32) {
    %c0_i32 = arith.constant 0 : i32
    %c0_i32_0 = arith.constant 0 : i32
    return %arg0, %c0_i32 : i32, i32
  }
  func.func @transform_1(%arg0: i32) -> (i32, i32) {
    %c0_i32 = arith.constant 0 : i32
    %c0_i32_0 = arith.constant 0 : i32
    %c0_i32_1 = arith.constant 0 : i32
    return %c0_i32, %c0_i32_0 : i32, i32
  }
  func.func @transform_2(%arg0: i32) -> (i32, i32) {
    %c0_i32 = arith.constant 0 : i32
    %c0_i32_0 = arith.constant 0 : i32
    %c0_i32_1 = arith.constant 0 : i32
    return %c0_i32, %c0_i32_0 : i32, i32
  }
  func.func @transform_3(%arg0: i32) -> (i32, i32) {
    %c0_i32 = arith.constant 0 : i32
    %c0_i32_0 = arith.constant 0 : i32
    return %arg0, %c0_i32 : i32, i32
  }
}

</mosaic_0001>

<llo_original>
// kernel: dummy_model_forward.1
$region0: #{dummy_model_forward.1}
  #allocation0 [shape = 'u32[]', space=smem, size = 0x4, offset = 0x4, fixed_abs, tag = 'smem constant byte address 0x4 - core index']
  #allocation1 [shape = 'u32[144,128]{1,0:T(1,128)}', space=vmem, size = 0x12000, scoped, tag = 'internal scratch']
  %s0 = inlined_call_operand.vmem [shape: bf16[16,300], index: 0, kind: input, shape index: {}]
  %s1 = inlined_call_operand.vmem [shape: bf16[300,8], index: 1, kind: input, shape index: {}]
  %s2 = inlined_call_operand.vmem [shape: f32[16,8], index: 2, kind: input, shape index: {}]
  %s3 = inlined_call_operand.vmem [shape: f32[16,2], index: 3, kind: output, shape index: {}]
  %s4 = sld [smem:[#allocation0]]
  $region22: #{dummy_model_forward.1} parent=0
    _
  %s6 = ssub.s32 1, %s4
  %s7 = scalar_select 0, %s6, %s4
  // Predicated region
  $region2: #{dummy_model_forward.1} parent=0 // pred_check
    _
  $region3: #{dummy_model_forward.1} parent=0 // pred_check_branch
    %9 = sbr.rel (0) target = $region5
  $region4: #{dummy_model_forward.1} parent=0 // pred_region
    _
  $region5: #{dummy_model_forward.1} parent=0 // pred_fallthru
    _
  // Predicated region
  $region6: #{dummy_model_forward.1} parent=0 // pred_check
    _
  $region7: #{dummy_model_forward.1} parent=0 // pred_check_branch
    %11 = sbr.rel (0) target = $region9
  $region8: #{dummy_model_forward.1} parent=0 // pred_region
    _
  $region9: #{dummy_model_forward.1} parent=0 // pred_fallthru
    _
  // Predicated region
  $region10: #{dummy_model_forward.1} parent=0 // pred_check
    _
  $region11: #{dummy_model_forward.1} parent=0 // pred_check_branch
    %13 = sbr.rel (0) target = $region13
  $region12: #{dummy_model_forward.1} parent=0 // pred_region
    _
  $region13: #{dummy_model_forward.1} parent=0 // pred_fallthru
    _
  %v15 = vld [vmem:[%s2] sm:$0xff]
  %v16 = vld [vmem:[%s2 + $0x8] sm:$0xff]
  %v17 = vld [vmem:[%s0] sm:$0xff]
  %v18 = vld [vmem:[%s0 + $0x8] sm:$0xf]
  %v19 = vld [vmem:[%s0 + $0xc] sm:$0xff]
  %v20 = vld [vmem:[%s0 + $0x14] sm:$0xf]
  %v21 = vld [vmem:[%s1] sm:$0xf]
  %v22 = vld [vmem:[%s1 + $0x4] sm:$0xf]
  %v23 = vld [vmem:[%s1 + $0x8] sm:$0xf]
  %v24 = vld [vmem:[%s1 + $0xc] sm:$0xf]
  %v25 = vld [vmem:[%s1 + $0x10] sm:$0xf]
  %v26 = vld [vmem:[%s1 + $0x14] sm:$0xf]
  %v27 = vld [vmem:[%s1 + $0x18] sm:$0xf]
  %v28 = vld [vmem:[%s1 + $0x1c] sm:$0xf]
  %v29 = vld [vmem:[%s1 + $0x20] sm:$0xf]
  %v30 = vld [vmem:[%s1 + $0x24] sm:$0xf]
  %v31 = vld [vmem:[%s1 + $0x28] sm:$0xf]
  %v32 = vld [vmem:[%s1 + $0x2c] sm:$0xf]
  %v33 = vld [vmem:[%s1 + $0x30] sm:$0xf]
  %v34 = vld [vmem:[%s1 + $0x34] sm:$0xf]
  %v35 = vld [vmem:[%s1 + $0x38] sm:$0xf]
  %v36 = vld [vmem:[%s1 + $0x3c] sm:$0xf]
  %v37 = vld [vmem:[%s1 + $0x40] sm:$0xf]
  %v38 = vld [vmem:[%s1 + $0x44] sm:$0xf]
  %v39 = vld [vmem:[%s1 + $0x48] sm:$0xf]
  %v40 = vld [vmem:[%s1 + $0x4c] sm:$0xf]
  %v41 = vld [vmem:[%s1 + $0x50] sm:$0xf]
  %v42 = vld [vmem:[%s1 + $0x54] sm:$0xf]
  %v43 = vld [vmem:[%s1 + $0x58] sm:$0xf]
  %v44 = vld [vmem:[%s1 + $0x5c] sm:$0xf]
  %v45 = vld [vmem:[%s1 + $0x60] sm:$0xf]
  %v46 = vld [vmem:[%s1 + $0x64] sm:$0xf]
  %v47 = vld [vmem:[%s1 + $0x68] sm:$0xf]
  %v48 = vld [vmem:[%s1 + $0x6c] sm:$0xf]
  %v49 = vld [vmem:[%s1 + $0x70] sm:$0xf]
  %v50 = vld [vmem:[%s1 + $0x74] sm:$0xf]
  %v51 = vld [vmem:[%s1 + $0x78] sm:$0xf]
  %v52 = vld [vmem:[%s1 + $0x7c] sm:$0xf]
  %v53 = vld [vmem:[%s1 + $0x80] sm:$0xf]
  %v54 = vld [vmem:[%s1 + $0x84] sm:$0xf]
  %v55 = vld [vmem:[%s1 + $0x88] sm:$0xf]
  %v56 = vld [vmem:[%s1 + $0x8c] sm:$0xf]
  %v57 = vld [vmem:[%s1 + $0x90] sm:$0xf]
  %v58 = vld [vmem:[%s1 + $0x94] sm:$0x3]
  %v59 = vlaneseq
  %v60 = vshrl.u32 %v59, 7
  %v61 = vsub.s32 0, %v60
  %v62 = vrot.slane %v16, %v61
  %v67 = vunpack.c.l.b16 %v17
  %v68 = vunpack.c.h.b16 %v17
  %v69 = vunpack.c.l.b16 %v18
  %v70 = vunpack.c.l.b16 %v19
  %v71 = vunpack.c.h.b16 %v19
  %v72 = vunpack.c.l.b16 %v20
  %v73 = vpack.c.b16 %v70, %v67
  %v74 = vpack.c.b16 %v71, %v68
  %v75 = vpack.c.b16 %v72, %v69
  %v116 = vunpack.c.l.b16 %v21
  %v117 = vunpack.c.l.b16 %v22
  %v118 = vunpack.c.l.b16 %v23
  %v119 = vunpack.c.l.b16 %v24
  %v120 = vunpack.c.l.b16 %v25
  %v121 = vunpack.c.l.b16 %v26
  %v122 = vunpack.c.l.b16 %v27
  %v123 = vunpack.c.l.b16 %v28
  %v124 = vunpack.c.l.b16 %v29
  %v125 = vunpack.c.l.b16 %v30
  %v126 = vunpack.c.l.b16 %v31
  %v127 = vunpack.c.l.b16 %v32
  %v128 = vunpack.c.l.b16 %v33
  %v129 = vunpack.c.l.b16 %v34
  %v130 = vunpack.c.l.b16 %v35
  %v131 = vunpack.c.l.b16 %v36
  %v132 = vunpack.c.l.b16 %v37
  %v133 = vunpack.c.l.b16 %v38
  %v134 = vunpack.c.l.b16 %v39
  %v135 = vunpack.c.l.b16 %v40
  %v136 = vunpack.c.l.b16 %v41
  %v137 = vunpack.c.l.b16 %v42
  %v138 = vunpack.c.l.b16 %v43
  %v139 = vunpack.c.l.b16 %v44
  %v140 = vunpack.c.l.b16 %v45
  %v141 = vunpack.c.l.b16 %v46
  %v142 = vunpack.c.l.b16 %v47
  %v143 = vunpack.c.l.b16 %v48
  %v144 = vunpack.c.l.b16 %v49
  %v145 = vunpack.c.l.b16 %v50
  %v146 = vunpack.c.l.b16 %v51
  %v147 = vunpack.c.l.b16 %v52
  %v148 = vunpack.c.l.b16 %v53
  %v149 = vunpack.c.l.b16 %v54
  %v150 = vunpack.c.l.b16 %v55
  %v151 = vunpack.c.l.b16 %v56
  %v152 = vunpack.c.l.b16 %v57
  %v153 = vunpack.c.l.b16 %v58
  %v154 = vpack.c.b16 %v117, %v116
  %v155 = vpack.c.b16 %v119, %v118
  %v156 = vpack.c.b16 %v121, %v120
  %v157 = vpack.c.b16 %v123, %v122
  %v158 = vpack.c.b16 %v125, %v124
  %v159 = vpack.c.b16 %v127, %v126
  %v160 = vpack.c.b16 %v129, %v128
  %v161 = vpack.c.b16 %v131, %v130
  %v162 = vpack.c.b16 %v133, %v132
  %v163 = vpack.c.b16 %v135, %v134
  %v164 = vpack.c.b16 %v137, %v136
  %v165 = vpack.c.b16 %v139, %v138
  %v166 = vpack.c.b16 %v141, %v140
  %v167 = vpack.c.b16 %v143, %v142
  %v168 = vpack.c.b16 %v145, %v144
  %v169 = vpack.c.b16 %v147, %v146
  %v170 = vpack.c.b16 %v149, %v148
  %v171 = vpack.c.b16 %v151, %v150
  %v172 = vpack.c.b16 %v153, %v152
  %vm191 = vcmask 359424
  %v193 = vsel %vm191, %v75, 0
  %vm195 = vcmask 1045504
  %v197 = vsel %vm195, %v172, 0
  %199 = vmatprep.subr.bf16.mxu0 0
  %200 = vmatpush1.bf16.msra.mxu0 %v154
  %201 = vmatprep.subr.bf16.mxu0 0
  %202 = vmatpush1.bf16.msra.mxu0 %v155
  %203 = vmatprep.subr.bf16.mxu0 0
  %204 = vmatpush1.bf16.msra.mxu0 %v156
  %205 = vmatprep.subr.bf16.mxu0 0
  %206 = vmatpush1.bf16.msra.mxu0 %v157
  %207 = vmatprep.subr.bf16.mxu0 0
  %208 = vmatpush1.bf16.msra.mxu0 %v158
  %209 = vmatprep.subr.bf16.mxu0 0
  %210 = vmatpush1.bf16.msra.mxu0 %v159
  %211 = vmatprep.subr.bf16.mxu0 0
  %212 = vmatpush1.bf16.msra.mxu0 %v160
  %213 = vmatprep.subr.bf16.mxu0 0
  %214 = vmatpush1.bf16.msra.mxu0 %v161
  %215 = vmatprep.subr.bf16.mxu0 0
  %216 = vmatpush1.bf16.msra.mxu0 %v162
  %217 = vmatprep.subr.bf16.mxu0 0
  %218 = vmatpush1.bf16.msra.mxu0 %v163
  %219 = vmatprep.subr.bf16.mxu0 0
  %220 = vmatpush1.bf16.msra.mxu0 %v164
  %221 = vmatprep.subr.bf16.mxu0 0
  %222 = vmatpush1.bf16.msra.mxu0 %v165
  %223 = vmatprep.subr.bf16.mxu0 0
  %224 = vmatpush1.bf16.msra.mxu0 %v166
  %225 = vmatprep.subr.bf16.mxu0 0
  %226 = vmatpush1.bf16.msra.mxu0 %v167
  %227 = vmatprep.subr.bf16.mxu0 0
  %228 = vmatpush1.bf16.msra.mxu0 %v168
  %229 = vmatprep.subr.bf16.mxu0 0
  %230 = vmatpush1.bf16.msra.mxu0 %v169
  %231 = vmatprep.mubr.bf16.mxu0 %v74
  %232 = vmatmul.mubr.bf16.gmra.mrb[0].mxu0 %v73
  %v233 = vpop.f32.mrb[0].mxu0
  %v234 = vadd.f32 %v62, %v233
  %v235 = vpop.f32.mrb[0].mxu0
  %v236 = vpop.f32.mrb[0].mxu0
  %v237 = vadd.f32 %v62, %v236
  %v238 = vpop.f32.mrb[0].mxu0
  %239 = vdwg.mxu0
  %240 = vmatprep.subr.bf16.mxu0 0
  %241 = vmatpush1.bf16.msra.mxu0 %v170
  %242 = vmatprep.subr.bf16.mxu0 0
  %243 = vmatpush1.bf16.msra.mxu0 %v171
  %244 = vmatprep.subr.bf16.mxu0 0
  %245 = vmatpush1.bf16.msra.mxu0 %v197
  %246 = vmatprep.subr.bf16.mxu0 0
  %247 = vmatpush1.bf16.msra.mxu0 0
  %248 = vmatprep.subr.bf16.mxu0 0
  %249 = vmatpush1.bf16.msra.mxu0 0
  %250 = vmatprep.subr.bf16.mxu0 0
  %251 = vmatpush1.bf16.msra.mxu0 0
  %252 = vmatprep.subr.bf16.mxu0 0
  %253 = vmatpush1.bf16.msra.mxu0 0
  %254 = vmatprep.subr.bf16.mxu0 0
  %255 = vmatpush1.bf16.msra.mxu0 0
  %256 = vmatprep.subr.bf16.mxu0 0
  %257 = vmatpush1.bf16.msra.mxu0 0
  %258 = vmatprep.subr.bf16.mxu0 0
  %259 = vmatpush1.bf16.msra.mxu0 0
  %260 = vmatprep.subr.bf16.mxu0 0
  %261 = vmatpush1.bf16.msra.mxu0 0
  %262 = vmatprep.subr.bf16.mxu0 0
  %263 = vmatpush1.bf16.msra.mxu0 0
  %264 = vmatprep.subr.bf16.mxu0 0
  %265 = vmatpush1.bf16.msra.mxu0 0
  %266 = vmatprep.subr.bf16.mxu0 0
  %267 = vmatpush1.bf16.msra.mxu0 0
  %268 = vmatprep.subr.bf16.mxu0 0
  %269 = vmatpush1.bf16.msra.mxu0 0
  %270 = vmatprep.subr.bf16.mxu0 0
  %271 = vmatpush1.bf16.msra.mxu0 0
  %272 = vmatprep.mubr.bf16.mxu0 0
  %273 = vmatmul.mubr.bf16.gmra.mrb[0].mxu0 %v193
  %v274 = vpop.f32.mrb[0].mxu0
  %v275 = vadd.f32 %v234, %v274
  %v276 = vpop.f32.mrb[0].mxu0
  %v277 = vpop.f32.mrb[0].mxu0
  %v278 = vadd.f32 %v237, %v277
  %v279 = vpop.f32.mrb[0].mxu0
  %280 = vdwg.mxu0
  %v281 = vmax.f32 %v275, 0.0
  %v282 = vmax.f32 %v278, 0.0
  %v283 = vlaneseq
  %v284 = vshrl.u32 %v283, 7
  %v285 = vsub.s32 1, %v284
  %v286 = vrot.slane %v16, %v285
  %vm287 = vcmask 64512
  %v289 = vsel %vm287, %v281, 0
  %v292 = vsel %vm287, %v282, 0
  %294 = vmatprep.subr.mxu0 0.0
  %295 = vmatpush1.msra.mxu0 %v15
  %296 = vmatprep.subr.mxu0 0.0
  %297 = vmatpush1.msra.mxu0 0.0
  %298 = vmatprep.subr.mxu0 0.0
  %299 = vmatpush1.msra.mxu0 0.0
  %300 = vmatprep.subr.mxu0 0.0
  %301 = vmatpush1.msra.mxu0 0.0
  %302 = vmatprep.subr.mxu0 0.0
  %303 = vmatpush1.msra.mxu0 0.0
  %304 = vmatprep.subr.mxu0 0.0
  %305 = vmatpush1.msra.mxu0 0.0
  %306 = vmatprep.subr.mxu0 0.0
  %307 = vmatpush1.msra.mxu0 0.0
  %308 = vmatprep.subr.mxu0 0.0
  %309 = vmatpush1.msra.mxu0 0.0
  %310 = vmatprep.subr.mxu0 0.0
  %311 = vmatpush1.msra.mxu0 0.0
  %312 = vmatprep.subr.mxu0 0.0
  %313 = vmatpush1.msra.mxu0 0.0
  %314 = vmatprep.subr.mxu0 0.0
  %315 = vmatpush1.msra.mxu0 0.0
  %316 = vmatprep.subr.mxu0 0.0
  %317 = vmatpush1.msra.mxu0 0.0
  %318 = vmatprep.subr.mxu0 0.0
  %319 = vmatpush1.msra.mxu0 0.0
  %320 = vmatprep.subr.mxu0 0.0
  %321 = vmatpush1.msra.mxu0 0.0
  %322 = vmatprep.subr.mxu0 0.0
  %323 = vmatpush1.msra.mxu0 0.0
  %324 = vmatprep.subr.mxu0 0.0
  %325 = vmatpush1.msra.mxu0 0.0
  %326 = vmatprep.subr.mxu0 0.0
  %327 = vmatpush1.msra.mxu0 0.0
  %328 = vmatprep.subr.mxu0 0.0
  %329 = vmatpush1.msra.mxu0 0.0
  %330 = vmatprep.subr.mxu0 0.0
  %331 = vmatpush1.msra.mxu0 0.0
  %332 = vmatprep.subr.mxu0 0.0
  %333 = vmatpush1.msra.mxu0 0.0
  %334 = vmatprep.subr.mxu0 0.0
  %335 = vmatpush1.msra.mxu0 0.0
  %336 = vmatprep.subr.mxu0 0.0
  %337 = vmatpush1.msra.mxu0 0.0
  %338 = vmatprep.subr.mxu0 0.0
  %339 = vmatpush1.msra.mxu0 0.0
  %340 = vmatprep.subr.mxu0 0.0
  %341 = vmatpush1.msra.mxu0 0.0
  %342 = vmatprep.subr.mxu0 0.0
  %343 = vmatpush1.msra.mxu0 0.0
  %344 = vmatprep.subr.mxu0 0.0
  %345 = vmatpush1.msra.mxu0 0.0
  %346 = vmatprep.subr.mxu0 0.0
  %347 = vmatpush1.msra.mxu0 0.0
  %348 = vmatprep.subr.mxu0 0.0
  %349 = vmatpush1.msra.mxu0 0.0
  %350 = vmatprep.subr.mxu0 0.0
  %351 = vmatpush1.msra.mxu0 0.0
  %352 = vmatprep.subr.mxu0 0.0
  %353 = vmatpush1.msra.mxu0 0.0
  %354 = vmatprep.subr.mxu0 0.0
  %355 = vmatpush1.msra.mxu0 0.0
  %356 = vmatprep.subr.mxu0 0.0
  %357 = vmatpush1.msra.mxu0 0.0
  %358 = vmatprep.mubr.f32.mxu0 0.0
  %359 = vmatmul.mubr.f32.gmra.mrb[0].mxu0 %v289
  %v360 = vpop.f32.mrb[0].mxu0
  %v361 = vadd.f32 %v286, %v360
  %v362 = vpop.f32.mrb[0].mxu0
  %363 = vmatprep.mubr.f32.mxu0 0.0
  %364 = vmatmul.mubr.f32.gmra.mrb[0].mxu0 %v292
  %v365 = vpop.f32.mrb[0].mxu0
  %v366 = vadd.f32 %v286, %v365
  %v367 = vpop.f32.mrb[0].mxu0
  %368 = vdwg.mxu0
  %vm369 = vcmask 15360
  %370 = vst.msk [vmem:[%s3] sm:$0xff] %vm369, %v361
  %371 = vst.msk [vmem:[%s3 + $0x8] sm:$0xff] %vm369, %v366
  // Predicated region
  $region14: #{dummy_model_forward.1} parent=0 // pred_check
    _
  $region15: #{dummy_model_forward.1} parent=0 // pred_check_branch
    %373 = sbr.rel (0) target = $region17
  $region16: #{dummy_model_forward.1} parent=0 // pred_region
    _
  $region17: #{dummy_model_forward.1} parent=0 // pred_fallthru
    _
  // Predicated region
  $region18: #{dummy_model_forward.1} parent=0 // pred_check
    _
  $region19: #{dummy_model_forward.1} parent=0 // pred_check_branch
    %375 = sbr.rel (0) target = $region21
  $region20: #{dummy_model_forward.1} parent=0 // pred_region
    _
  $region21: #{dummy_model_forward.1} parent=0 // pred_fallthru
    _

</llo_original>
